<compile_context>
chip_gen: v6e
topology: v6e:2x2x1
jax: 0.10.0
libtpu: 0.0.40
codegen_flags: <defaults>
</compile_context>

<pallas_src>
import jax
import jax.numpy as jnp
from jax.experimental import pallas as pl
from jax.experimental.pallas import tpu as pltpu


def _mlp_kernel(x_ref, w1_ref, p_ref, o_ref):
    # Cast the activation tile at the MXU (in VMEM), not in HBM: no extra HBM
    # pass over x, and the MXU sees matching (bf16 or f32) operands.
    x = x_ref[...].astype(w1_ref.dtype)
    # fc1 on the MXU, f32 accumulation.
    h = jnp.dot(x, w1_ref[...], preferred_element_type=jnp.float32)    # (TB, 32)
    h = h + p_ref[0:1, :]                                              # + b1
    # grad_reverse -> identity (forward); Dropout1d -> identity (inference).
    h = jnp.where(h > 0, h, 0.01 * h)                                  # LeakyReLU(0.01)
    # fc2 (32 -> 1): VPU multiply + lane reduction (avoids an N=1 MXU matmul).
    y = jnp.sum(h * p_ref[1:2, :], axis=-1, keepdims=True) + p_ref[2:3, 0:1]
    o_ref[...] = y.astype(o_ref.dtype)


def domain_classifier_mlp_forward(x, w1, b1, w2, b2, *, tb=2048,
                                  mxu_dtype=jnp.bfloat16, core_parallel=False):
    """Forward pass of domain_classifier_mlp.

    x : (B, D_in) activations
    w1: (D_in, 32), b1: (32,)   -- fc1 (weights pre-transposed to (in, out))
    w2: (32, 1),   b2: (1,)     -- fc2
    mxu_dtype: dtype the MXU operands are cast to (w1 in the wrapper — tiny;
               the x tile in-kernel — no extra HBM pass).  None => keep x.dtype
               (exact f32 path).
    core_parallel: map the batch-tile grid axis with pltpu.CORE_PARALLEL
               (use on multi-TensorCore parts, e.g. v7x).
    """
    B, D = x.shape
    H = w1.shape[1]
    OUT = w2.shape[1]

    # fc1 weight in the dtype the MXU should see (tiny wrapper-side cast).
    w1_mxu = w1 if mxu_dtype is None else w1.astype(mxu_dtype)

    # Pack the tiny per-feature params into one resident (3, H) block:
    #   row 0 = b1, row 1 = fc2 weight row, row 2[0] = b2.
    params = jnp.zeros((3, H), jnp.float32)
    params = params.at[0, :].set(b1.astype(jnp.float32))
    params = params.at[1, :].set(w2[:, 0].astype(jnp.float32))
    params = params.at[2, 0].set(b2[0].astype(jnp.float32))

    # Batch tiling with NO padding pass over x for B >= 8: TB is a multiple of
    # 8 sublanes and <= B, so only the *last* block is ragged (its out-of-range
    # rows are computed on stale VMEM data and their writes are discarded —
    # row-independent math, so valid rows are unaffected).
    if B >= 8:
        TB = max(8, min(tb, (B // 8) * 8))
        x_in = x
        B_arr = B
    else:
        # Tiny batch: pad up to a single 8-row block (negligible copy).
        TB = 8
        x_in = jnp.pad(x, ((0, 8 - B), (0, 0)))
        B_arr = 8
    grid = (pl.cdiv(B_arr, TB),)

    # VMEM budget: x double-buffer + resident w1 + lane-padded (TB,128) output
    # buffers + params tile + compiler scratch margin.
    itemsize_x = jnp.dtype(x_in.dtype).itemsize
    itemsize_w = jnp.dtype(w1_mxu.dtype).itemsize
    vmem_bytes = (2 * TB * D * itemsize_x
                  + 2 * D * H * itemsize_w
                  + 2 * TB * 128 * 4
                  + 2 * 8 * 128 * 4
                  + (4 << 20))
    vmem_limit = int(min(max(vmem_bytes, 32 << 20), 110 << 20))

    dims = (pltpu.CORE_PARALLEL,) if core_parallel else ("arbitrary",)

    out = pl.pallas_call(
        _mlp_kernel,
        out_shape=jax.ShapeDtypeStruct((B_arr, OUT), jnp.float32),
        grid_spec=pltpu.PrefetchScalarGridSpec(
            num_scalar_prefetch=0,
            grid=grid,
            in_specs=[
                pl.BlockSpec((TB, D), lambda i: (i, 0)),   # x: streamed, unpadded D
                pl.BlockSpec((D, H), lambda i: (0, 0)),    # w1: resident
                pl.BlockSpec((3, H), lambda i: (0, 0)),    # packed b1/w2/b2: resident
            ],
            out_specs=pl.BlockSpec((TB, OUT), lambda i: (i, 0)),
        ),
        compiler_params=pltpu.CompilerParams(
            dimension_semantics=dims,
            vmem_limit_bytes=vmem_limit,
        ),
    )(x_in, w1_mxu, params)

    return out[:B]


def init_params(key, input_dim=1200, hidden=32, out_dim=1):
    """Deterministic init mimicking PyTorch Linear's U(-1/sqrt(fan_in), 1/sqrt(fan_in))."""
    k1, k2, k3, k4 = jax.random.split(key, 4)
    bound1 = 1.0 / jnp.sqrt(jnp.float32(input_dim))
    bound2 = 1.0 / jnp.sqrt(jnp.float32(hidden))
    w1 = jax.random.uniform(k1, (input_dim, hidden), jnp.float32, -bound1, bound1)
    b1 = jax.random.uniform(k2, (hidden,), jnp.float32, -bound1, bound1)
    w2 = jax.random.uniform(k3, (hidden, out_dim), jnp.float32, -bound2, bound2)
    b2 = jax.random.uniform(k4, (out_dim,), jnp.float32, -bound2, bound2)
    return w1, b1, w2, b2


def _reference(x, w1, b1, w2, b2):
    h = x @ w1 + b1
    h = jnp.where(h > 0, h, 0.01 * h)
    return h @ w2 + b2


if __name__ == "__main__":
    key = jax.random.PRNGKey(0)
    kx, kx2, kp = jax.random.split(key, 3)

    INPUT_DIM = 1200
    w1, b1, w2, b2 = init_params(kp, input_dim=INPUT_DIM)

    # --- small batch (B=2): exercises the tiny-batch single-block path ---
    B = 2
    x = jax.random.normal(kx, (B, INPUT_DIM), jnp.float32)

    # exact f32 MXU path
    out = domain_classifier_mlp_forward(x, w1, b1, w2, b2, mxu_dtype=None)
    out = jax.block_until_ready(out)
    ref = _reference(x, w1, b1, w2, b2)
    assert out.shape == (B, 1)
    assert jnp.allclose(out, ref, atol=1e-4, rtol=1e-4)

    # default fast path: bf16 MXU operands, f32 accumulation
    out_bf16 = domain_classifier_mlp_forward(x, w1, b1, w2, b2)
    out_bf16 = jax.block_until_ready(out_bf16)
    ref_bf16 = _reference(
        x.astype(jnp.bfloat16).astype(jnp.float32),
        w1.astype(jnp.bfloat16).astype(jnp.float32),
        b1, w2, b2,
    )
    assert out_bf16.shape == (B, 1)
    assert jnp.allclose(out_bf16, ref_bf16, atol=1e-2, rtol=1e-2)

    # --- ragged batch (B=20, TB=16): exercises the no-padding ragged-tile path ---
    B2 = 20
    x2 = jax.random.normal(kx2, (B2, INPUT_DIM), jnp.float32)

    out2 = domain_classifier_mlp_forward(x2, w1, b1, w2, b2, mxu_dtype=None, tb=16)
    out2 = jax.block_until_ready(out2)
    ref2 = _reference(x2, w1, b1, w2, b2)
    assert out2.shape == (B2, 1)
    assert jnp.allclose(out2, ref2, atol=1e-4, rtol=1e-4)

    out2_bf16 = domain_classifier_mlp_forward(x2, w1, b1, w2, b2, tb=16)
    out2_bf16 = jax.block_until_ready(out2_bf16)
    ref2_bf16 = _reference(
        x2.astype(jnp.bfloat16).astype(jnp.float32),
        w1.astype(jnp.bfloat16).astype(jnp.float32),
        b1, w2, b2,
    )
    assert jnp.allclose(out2_bf16, ref2_bf16, atol=1e-2, rtol=1e-2)

    print("KERNEL_OK")
</pallas_src>

<mosaic_0001>
module attributes {stable_mosaic.version = 11 : i64} {
  func.func @_mlp_kernel(%arg0: i32, %arg1: memref<8x1200xf32, #tpu.memory_space<vmem>>, %arg2: memref<1200x32xf32, #tpu.memory_space<vmem>>, %arg3: memref<3x32xf32, #tpu.memory_space<vmem>>, %arg4: memref<8x1xf32, #tpu.memory_space<vmem>>) attributes {dimension_semantics = [#tpu.dimension_semantics<arbitrary>], iteration_bounds = array<i64: 1>, scalar_prefetch = 0 : i64, scratch_operands = 0 : i64, tpu.core_type = #tpu.core_type<tc>, window_params = [{transform_indices = @transform_0, window_bounds = array<i64: 8, 1200>}, {pipeline_mode = #tpu.pipeline_mode<synchronous>, transform_indices = @transform_1, window_bounds = array<i64: 1200, 32>}, {pipeline_mode = #tpu.pipeline_mode<synchronous>, transform_indices = @transform_2, window_bounds = array<i64: 3, 32>}, {transform_indices = @transform_3, window_bounds = array<i64: 8, 1>}]} {
    %c0 = arith.constant 0 : index
    %c0_0 = arith.constant 0 : index
    %0 = vector.load %arg1[%c0, %c0_0] : memref<8x1200xf32, #tpu.memory_space<vmem>>, vector<8x1200xf32>
    %c0_1 = arith.constant 0 : index
    %c0_2 = arith.constant 0 : index
    %1 = vector.load %arg2[%c0_1, %c0_2] : memref<1200x32xf32, #tpu.memory_space<vmem>>, vector<1200x32xf32>
    %cst = arith.constant dense<0.000000e+00> : vector<8x32xf32>
    %2 = tpu.matmul %0, %1, %cst {dimension_numbers = #tpu.dot_dimension_numbers<[1], [0], [0], [1], [0, 0, 1, 1], [], []>} : vector<8x1200xf32>, vector<1200x32xf32>, vector<8x32xf32> -> vector<8x32xf32>
    %c0_3 = arith.constant 0 : index
    %c0_4 = arith.constant 0 : index
    %3 = vector.load %arg3[%c0_3, %c0_4] : memref<3x32xf32, #tpu.memory_space<vmem>>, vector<1x32xf32>
    %4 = vector.broadcast %3 : vector<1x32xf32> to vector<8x32xf32>
    %5 = arith.addf %2, %4 : vector<8x32xf32>
    %cst_5 = arith.constant 0.000000e+00 : f32
    %6 = vector.broadcast %cst_5 : f32 to vector<8x32xf32>
    %7 = arith.cmpf ogt, %5, %6 : vector<8x32xf32>
    %cst_6 = arith.constant 0.00999999977 : f32
    %8 = vector.broadcast %cst_6 : f32 to vector<8x32xf32>
    %9 = arith.mulf %8, %5 : vector<8x32xf32>
    %10 = arith.select %7, %5, %9 : vector<8x32xi1>, vector<8x32xf32>
    %c1 = arith.constant 1 : index
    %c0_7 = arith.constant 0 : index
    %11 = vector.load %arg3[%c1, %c0_7] : memref<3x32xf32, #tpu.memory_space<vmem>>, vector<1x32xf32>
    %12 = vector.broadcast %11 : vector<1x32xf32> to vector<8x32xf32>
    %13 = arith.mulf %10, %12 : vector<8x32xf32>
    %cst_8 = arith.constant dense<0.000000e+00> : vector<8xf32>
    %14 = vector.multi_reduction <add>, %13, %cst_8 [1] : vector<8x32xf32> to vector<8xf32>
    %15 = vector.shape_cast %14 : vector<8xf32> to vector<8x1xf32>
    %c2 = arith.constant 2 : index
    %c0_9 = arith.constant 0 : index
    %16 = vector.load %arg3[%c2, %c0_9] : memref<3x32xf32, #tpu.memory_space<vmem>>, vector<1x1xf32>
    %17 = vector.broadcast %16 : vector<1x1xf32> to vector<8x1xf32>
    %18 = arith.addf %15, %17 : vector<8x1xf32>
    %c0_10 = arith.constant 0 : index
    %c0_11 = arith.constant 0 : index
    %19 = vector.load %arg4[%c0_10, %c0_11] : memref<8x1xf32, #tpu.memory_space<vmem>>, vector<8x1xf32>
    tpu.vector_store %arg4[%c0_10, %c0_11], %18 {strides = array<i32>} : memref<8x1xf32, #tpu.memory_space<vmem>>, vector<8x1xf32>,
    return
  }
  func.func @transform_0(%arg0: i32) -> (i32, i32) {
    %c0_i32 = arith.constant 0 : i32
    %c0_i32_0 = arith.constant 0 : i32
    return %arg0, %c0_i32 : i32, i32
  }
  func.func @transform_1(%arg0: i32) -> (i32, i32) {
    %c0_i32 = arith.constant 0 : i32
    %c0_i32_0 = arith.constant 0 : i32
    %c0_i32_1 = arith.constant 0 : i32
    return %c0_i32, %c0_i32_0 : i32, i32
  }
  func.func @transform_2(%arg0: i32) -> (i32, i32) {
    %c0_i32 = arith.constant 0 : i32
    %c0_i32_0 = arith.constant 0 : i32
    %c0_i32_1 = arith.constant 0 : i32
    return %c0_i32, %c0_i32_0 : i32, i32
  }
  func.func @transform_3(%arg0: i32) -> (i32, i32) {
    %c0_i32 = arith.constant 0 : i32
    %c0_i32_0 = arith.constant 0 : i32
    return %arg0, %c0_i32 : i32, i32
  }
}

</mosaic_0001>

<llo_original>
// kernel: tpu_custom_call.1
$region0: #{tpu_custom_call.1}
  #allocation0 [shape = 'u32[]', space=smem, size = 0x4, offset = 0x4, fixed_abs, tag = 'smem constant byte address 0x4 - core index']
  #allocation1 [shape = 'u32[144,128]{1,0:T(1,128)}', space=vmem, size = 0x12000, scoped, tag = 'internal scratch']
  %s0 = inlined_call_operand.vmem [shape: f32[8,1200], index: 0, kind: input, shape index: {}]
  %s1 = inlined_call_operand.vmem [shape: f32[1200,32], index: 1, kind: input, shape index: {}]
  %s2 = inlined_call_operand.vmem [shape: f32[3,32], index: 2, kind: input, shape index: {}]
  %s3 = inlined_call_operand.vmem [shape: f32[8,1], index: 3, kind: output, shape index: {}]
  %s4 = sld [smem:[#allocation0]]
  $region22: #{tpu_custom_call.1} parent=0
    _
  %s6 = ssub.s32 1, %s4
  %s7 = scalar_select 0, %s6, %s4
  // Predicated region
  $region2: #{tpu_custom_call.1} parent=0 // pred_check
    _
  $region3: #{tpu_custom_call.1} parent=0 // pred_check_branch
    %9 = sbr.rel (0) target = $region5
  $region4: #{tpu_custom_call.1} parent=0 // pred_region
    _
  $region5: #{tpu_custom_call.1} parent=0 // pred_fallthru
    _
  // Predicated region
  $region6: #{tpu_custom_call.1} parent=0 // pred_check
    _
  $region7: #{tpu_custom_call.1} parent=0 // pred_check_branch
    %11 = sbr.rel (0) target = $region9
  $region8: #{tpu_custom_call.1} parent=0 // pred_region
    _
  $region9: #{tpu_custom_call.1} parent=0 // pred_fallthru
    _
  // Predicated region
  $region10: #{tpu_custom_call.1} parent=0 // pred_check
    _
  $region11: #{tpu_custom_call.1} parent=0 // pred_check_branch
    %13 = sbr.rel (0) target = $region13
  $region12: #{tpu_custom_call.1} parent=0 // pred_region
    _
  $region13: #{tpu_custom_call.1} parent=0 // pred_fallthru
    _
  %v14 = vld [vmem:[%s0] sm:$0xff]
  %v15 = vld [vmem:[%s0 + $0x8] sm:$0xff]
  %v16 = vld [vmem:[%s0 + $0x10] sm:$0xff]
  %v17 = vld [vmem:[%s0 + $0x18] sm:$0xff]
  %v18 = vld [vmem:[%s0 + $0x20] sm:$0xff]
  %v19 = vld [vmem:[%s0 + $0x28] sm:$0xff]
  %v20 = vld [vmem:[%s0 + $0x30] sm:$0xff]
  %v21 = vld [vmem:[%s0 + $0x38] sm:$0xff]
  %v22 = vld [vmem:[%s0 + $0x40] sm:$0xff]
  %v23 = vld [vmem:[%s0 + $0x48] sm:$0xff]
  %v24 = vld [vmem:[%s1] sm:$0xff]
  %v25 = vld [vmem:[%s1 + $0x8] sm:$0xff]
  %v26 = vld [vmem:[%s1 + $0x10] sm:$0xff]
  %v27 = vld [vmem:[%s1 + $0x18] sm:$0xff]
  %v28 = vld [vmem:[%s1 + $0x20] sm:$0xff]
  %v29 = vld [vmem:[%s1 + $0x28] sm:$0xff]
  %v30 = vld [vmem:[%s1 + $0x30] sm:$0xff]
  %v31 = vld [vmem:[%s1 + $0x38] sm:$0xff]
  %v32 = vld [vmem:[%s1 + $0x40] sm:$0xff]
  %v33 = vld [vmem:[%s1 + $0x48] sm:$0xff]
  %v34 = vld [vmem:[%s1 + $0x50] sm:$0xff]
  %v35 = vld [vmem:[%s1 + $0x58] sm:$0xff]
  %v36 = vld [vmem:[%s1 + $0x60] sm:$0xff]
  %v37 = vld [vmem:[%s1 + $0x68] sm:$0xff]
  %v38 = vld [vmem:[%s1 + $0x70] sm:$0xff]
  %v39 = vld [vmem:[%s1 + $0x78] sm:$0xff]
  %v40 = vld [vmem:[%s1 + $0x80] sm:$0xff]
  %v41 = vld [vmem:[%s1 + $0x88] sm:$0xff]
  %v42 = vld [vmem:[%s1 + $0x90] sm:$0xff]
  %v43 = vld [vmem:[%s1 + $0x98] sm:$0xff]
  %v44 = vld [vmem:[%s1 + $0xa0] sm:$0xff]
  %v45 = vld [vmem:[%s1 + $0xa8] sm:$0xff]
  %v46 = vld [vmem:[%s1 + $0xb0] sm:$0xff]
  %v47 = vld [vmem:[%s1 + $0xb8] sm:$0xff]
  %v48 = vld [vmem:[%s1 + $0xc0] sm:$0xff]
  %v49 = vld [vmem:[%s1 + $0xc8] sm:$0xff]
  %v50 = vld [vmem:[%s1 + $0xd0] sm:$0xff]
  %v51 = vld [vmem:[%s1 + $0xd8] sm:$0xff]
  %v52 = vld [vmem:[%s1 + $0xe0] sm:$0xff]
  %v53 = vld [vmem:[%s1 + $0xe8] sm:$0xff]
  %v54 = vld [vmem:[%s1 + $0xf0] sm:$0xff]
  %v55 = vld [vmem:[%s1 + $0xf8] sm:$0xff]
  %v56 = vld [vmem:[%s1 + $0x100] sm:$0xff]
  %v57 = vld [vmem:[%s1 + $0x108] sm:$0xff]
  %v58 = vld [vmem:[%s1 + $0x110] sm:$0xff]
  %v59 = vld [vmem:[%s1 + $0x118] sm:$0xff]
  %v60 = vld [vmem:[%s1 + $0x120] sm:$0xff]
  %v61 = vld [vmem:[%s1 + $0x128] sm:$0xff]
  %v62 = vld [vmem:[%s1 + $0x130] sm:$0xff]
  %v63 = vld [vmem:[%s1 + $0x138] sm:$0xff]
  %v64 = vld [vmem:[%s1 + $0x140] sm:$0xff]
  %v65 = vld [vmem:[%s1 + $0x148] sm:$0xff]
  %v66 = vld [vmem:[%s1 + $0x150] sm:$0xff]
  %v67 = vld [vmem:[%s1 + $0x158] sm:$0xff]
  %v68 = vld [vmem:[%s1 + $0x160] sm:$0xff]
  %v69 = vld [vmem:[%s1 + $0x168] sm:$0xff]
  %v70 = vld [vmem:[%s1 + $0x170] sm:$0xff]
  %v71 = vld [vmem:[%s1 + $0x178] sm:$0xff]
  %v72 = vld [vmem:[%s1 + $0x180] sm:$0xff]
  %v73 = vld [vmem:[%s1 + $0x188] sm:$0xff]
  %v74 = vld [vmem:[%s1 + $0x190] sm:$0xff]
  %v75 = vld [vmem:[%s1 + $0x198] sm:$0xff]
  %v76 = vld [vmem:[%s1 + $0x1a0] sm:$0xff]
  %v77 = vld [vmem:[%s1 + $0x1a8] sm:$0xff]
  %v78 = vld [vmem:[%s1 + $0x1b0] sm:$0xff]
  %v79 = vld [vmem:[%s1 + $0x1b8] sm:$0xff]
  %v80 = vld [vmem:[%s1 + $0x1c0] sm:$0xff]
  %v81 = vld [vmem:[%s1 + $0x1c8] sm:$0xff]
  %v82 = vld [vmem:[%s1 + $0x1d0] sm:$0xff]
  %v83 = vld [vmem:[%s1 + $0x1d8] sm:$0xff]
  %v84 = vld [vmem:[%s1 + $0x1e0] sm:$0xff]
  %v85 = vld [vmem:[%s1 + $0x1e8] sm:$0xff]
  %v86 = vld [vmem:[%s1 + $0x1f0] sm:$0xff]
  %v87 = vld [vmem:[%s1 + $0x1f8] sm:$0xff]
  %v88 = vld [vmem:[%s1 + $0x200] sm:$0xff]
  %v89 = vld [vmem:[%s1 + $0x208] sm:$0xff]
  %v90 = vld [vmem:[%s1 + $0x210] sm:$0xff]
  %v91 = vld [vmem:[%s1 + $0x218] sm:$0xff]
  %v92 = vld [vmem:[%s1 + $0x220] sm:$0xff]
  %v93 = vld [vmem:[%s1 + $0x228] sm:$0xff]
  %v94 = vld [vmem:[%s1 + $0x230] sm:$0xff]
  %v95 = vld [vmem:[%s1 + $0x238] sm:$0xff]
  %v96 = vld [vmem:[%s1 + $0x240] sm:$0xff]
  %v97 = vld [vmem:[%s1 + $0x248] sm:$0xff]
  %v98 = vld [vmem:[%s1 + $0x250] sm:$0xff]
  %v99 = vld [vmem:[%s1 + $0x258] sm:$0xff]
  %v100 = vld [vmem:[%s1 + $0x260] sm:$0xff]
  %v101 = vld [vmem:[%s1 + $0x268] sm:$0xff]
  %v102 = vld [vmem:[%s1 + $0x270] sm:$0xff]
  %v103 = vld [vmem:[%s1 + $0x278] sm:$0xff]
  %v104 = vld [vmem:[%s1 + $0x280] sm:$0xff]
  %v105 = vld [vmem:[%s1 + $0x288] sm:$0xff]
  %v106 = vld [vmem:[%s1 + $0x290] sm:$0xff]
  %v107 = vld [vmem:[%s1 + $0x298] sm:$0xff]
  %v108 = vld [vmem:[%s1 + $0x2a0] sm:$0xff]
  %v109 = vld [vmem:[%s1 + $0x2a8] sm:$0xff]
  %v110 = vld [vmem:[%s1 + $0x2b0] sm:$0xff]
  %v111 = vld [vmem:[%s1 + $0x2b8] sm:$0xff]
  %v112 = vld [vmem:[%s1 + $0x2c0] sm:$0xff]
  %v113 = vld [vmem:[%s1 + $0x2c8] sm:$0xff]
  %v114 = vld [vmem:[%s1 + $0x2d0] sm:$0xff]
  %v115 = vld [vmem:[%s1 + $0x2d8] sm:$0xff]
  %v116 = vld [vmem:[%s1 + $0x2e0] sm:$0xff]
  %v117 = vld [vmem:[%s1 + $0x2e8] sm:$0xff]
  %v118 = vld [vmem:[%s1 + $0x2f0] sm:$0xff]
  %v119 = vld [vmem:[%s1 + $0x2f8] sm:$0xff]
  %v120 = vld [vmem:[%s1 + $0x300] sm:$0xff]
  %v121 = vld [vmem:[%s1 + $0x308] sm:$0xff]
  %v122 = vld [vmem:[%s1 + $0x310] sm:$0xff]
  %v123 = vld [vmem:[%s1 + $0x318] sm:$0xff]
  %v124 = vld [vmem:[%s1 + $0x320] sm:$0xff]
  %v125 = vld [vmem:[%s1 + $0x328] sm:$0xff]
  %v126 = vld [vmem:[%s1 + $0x330] sm:$0xff]
  %v127 = vld [vmem:[%s1 + $0x338] sm:$0xff]
  %v128 = vld [vmem:[%s1 + $0x340] sm:$0xff]
  %v129 = vld [vmem:[%s1 + $0x348] sm:$0xff]
  %v130 = vld [vmem:[%s1 + $0x350] sm:$0xff]
  %v131 = vld [vmem:[%s1 + $0x358] sm:$0xff]
  %v132 = vld [vmem:[%s1 + $0x360] sm:$0xff]
  %v133 = vld [vmem:[%s1 + $0x368] sm:$0xff]
  %v134 = vld [vmem:[%s1 + $0x370] sm:$0xff]
  %v135 = vld [vmem:[%s1 + $0x378] sm:$0xff]
  %v136 = vld [vmem:[%s1 + $0x380] sm:$0xff]
  %v137 = vld [vmem:[%s1 + $0x388] sm:$0xff]
  %v138 = vld [vmem:[%s1 + $0x390] sm:$0xff]
  %v139 = vld [vmem:[%s1 + $0x398] sm:$0xff]
  %v140 = vld [vmem:[%s1 + $0x3a0] sm:$0xff]
  %v141 = vld [vmem:[%s1 + $0x3a8] sm:$0xff]
  %v142 = vld [vmem:[%s1 + $0x3b0] sm:$0xff]
  %v143 = vld [vmem:[%s1 + $0x3b8] sm:$0xff]
  %v144 = vld [vmem:[%s1 + $0x3c0] sm:$0xff]
  %v145 = vld [vmem:[%s1 + $0x3c8] sm:$0xff]
  %v146 = vld [vmem:[%s1 + $0x3d0] sm:$0xff]
  %v147 = vld [vmem:[%s1 + $0x3d8] sm:$0xff]
  %v148 = vld [vmem:[%s1 + $0x3e0] sm:$0xff]
  %v149 = vld [vmem:[%s1 + $0x3e8] sm:$0xff]
  %v150 = vld [vmem:[%s1 + $0x3f0] sm:$0xff]
  %v151 = vld [vmem:[%s1 + $0x3f8] sm:$0xff]
  %v152 = vld [vmem:[%s1 + $0x400] sm:$0xff]
  %v153 = vld [vmem:[%s1 + $0x408] sm:$0xff]
  %v154 = vld [vmem:[%s1 + $0x410] sm:$0xff]
  %v155 = vld [vmem:[%s1 + $0x418] sm:$0xff]
  %v156 = vld [vmem:[%s1 + $0x420] sm:$0xff]
  %v157 = vld [vmem:[%s1 + $0x428] sm:$0xff]
  %v158 = vld [vmem:[%s1 + $0x430] sm:$0xff]
  %v159 = vld [vmem:[%s1 + $0x438] sm:$0xff]
  %v160 = vld [vmem:[%s1 + $0x440] sm:$0xff]
  %v161 = vld [vmem:[%s1 + $0x448] sm:$0xff]
  %v162 = vld [vmem:[%s1 + $0x450] sm:$0xff]
  %v163 = vld [vmem:[%s1 + $0x458] sm:$0xff]
  %v164 = vld [vmem:[%s1 + $0x460] sm:$0xff]
  %v165 = vld [vmem:[%s1 + $0x468] sm:$0xff]
  %v166 = vld [vmem:[%s1 + $0x470] sm:$0xff]
  %v167 = vld [vmem:[%s1 + $0x478] sm:$0xff]
  %v168 = vld [vmem:[%s1 + $0x480] sm:$0xff]
  %v169 = vld [vmem:[%s1 + $0x488] sm:$0xff]
  %v170 = vld [vmem:[%s1 + $0x490] sm:$0xff]
  %v171 = vld [vmem:[%s1 + $0x498] sm:$0xff]
  %v172 = vld [vmem:[%s1 + $0x4a0] sm:$0xff]
  %v173 = vld [vmem:[%s1 + $0x4a8] sm:$0xff]
  %v174 = vld [vmem:[%s2] sm:$0x1]
  %v175 = vlaneseq
  %v176 = vshrl.u32 %v175, 7
  %v177 = vsub.s32 0, %v176
  %v178 = vrot.slane %v174, %v177
  %vm179 = vcmask 392192
  %v181 = vsel %vm179, %v23, 0
  %183 = vmatprep.subr.mxu0 0.0
  %184 = vmatpush1.msra.mxu0 %v39
  %185 = vmatprep.subr.mxu0 0.0
  %186 = vmatpush1.msra.mxu0 %v38
  %187 = vmatprep.subr.mxu0 0.0
  %188 = vmatpush1.msra.mxu0 %v37
  %189 = vmatprep.subr.mxu0 0.0
  %190 = vmatpush1.msra.mxu0 %v36
  %191 = vmatprep.subr.mxu0 0.0
  %192 = vmatpush1.msra.mxu0 %v35
  %193 = vmatprep.subr.mxu0 0.0
  %194 = vmatpush1.msra.mxu0 %v34
  %195 = vmatprep.subr.mxu0 0.0
  %196 = vmatpush1.msra.mxu0 %v33
  %197 = vmatprep.subr.mxu0 0.0
  %198 = vmatpush1.msra.mxu0 %v32
  %199 = vmatprep.subr.mxu0 0.0
  %200 = vmatpush1.msra.mxu0 %v31
  %201 = vmatprep.subr.mxu0 0.0
  %202 = vmatpush1.msra.mxu0 %v30
  %203 = vmatprep.subr.mxu0 0.0
  %204 = vmatpush1.msra.mxu0 %v29
  %205 = vmatprep.subr.mxu0 0.0
  %206 = vmatpush1.msra.mxu0 %v28
  %207 = vmatprep.subr.mxu0 0.0
  %208 = vmatpush1.msra.mxu0 %v27
  %209 = vmatprep.subr.mxu0 0.0
  %210 = vmatpush1.msra.mxu0 %v26
  %211 = vmatprep.subr.mxu0 0.0
  %212 = vmatpush1.msra.mxu0 %v25
  %213 = vmatprep.subr.mxu0 0.0
  %214 = vmatpush1.msra.mxu0 %v24
  %215 = vmatprep.subr.mxu0 0.0
  %216 = vmatpush2.msra.mxu0 %v55
  %217 = vmatprep.subr.mxu0 0.0
  %218 = vmatpush2.msra.mxu0 %v54
  %219 = vmatprep.subr.mxu0 0.0
  %220 = vmatpush2.msra.mxu0 %v53
  %221 = vmatprep.subr.mxu0 0.0
  %222 = vmatpush2.msra.mxu0 %v52
  %223 = vmatprep.subr.mxu0 0.0
  %224 = vmatpush2.msra.mxu0 %v51
  %225 = vmatprep.subr.mxu0 0.0
  %226 = vmatpush2.msra.mxu0 %v50
  %227 = vmatprep.subr.mxu0 0.0
  %228 = vmatpush2.msra.mxu0 %v49
  %229 = vmatprep.subr.mxu0 0.0
  %230 = vmatpush2.msra.mxu0 %v48
  %231 = vmatprep.subr.mxu0 0.0
  %232 = vmatpush2.msra.mxu0 %v47
  %233 = vmatprep.subr.mxu0 0.0
  %234 = vmatpush2.msra.mxu0 %v46
  %235 = vmatprep.subr.mxu0 0.0
  %236 = vmatpush2.msra.mxu0 %v45
  %237 = vmatprep.subr.mxu0 0.0
  %238 = vmatpush2.msra.mxu0 %v44
  %239 = vmatprep.subr.mxu0 0.0
  %240 = vmatpush2.msra.mxu0 %v43
  %241 = vmatprep.subr.mxu0 0.0
  %242 = vmatpush2.msra.mxu0 %v42
  %243 = vmatprep.subr.mxu0 0.0
  %244 = vmatpush2.msra.mxu0 %v41
  %245 = vmatprep.subr.mxu0 0.0
  %246 = vmatpush2.msra.mxu0 %v40
  %247 = vmatprep.mubr.f32.mxu0 %v15
  %248 = vmatmul.mubr.f32.gmra.mxu0 %v14
  %v249 = vpop.f32.mrf.mxu0
  %v250 = vadd.f32 %v178, %v249
  %v251 = vpop.f32.mrf.mxu0
  %252 = vdwg.mxu0
  %253 = vmatprep.subr.mxu0 0.0
  %254 = vmatpush1.msra.mxu0 %v71
  %255 = vmatprep.subr.mxu0 0.0
  %256 = vmatpush1.msra.mxu0 %v70
  %257 = vmatprep.subr.mxu0 0.0
  %258 = vmatpush1.msra.mxu0 %v69
  %259 = vmatprep.subr.mxu0 0.0
  %260 = vmatpush1.msra.mxu0 %v68
  %261 = vmatprep.subr.mxu0 0.0
  %262 = vmatpush1.msra.mxu0 %v67
  %263 = vmatprep.subr.mxu0 0.0
  %264 = vmatpush1.msra.mxu0 %v66
  %265 = vmatprep.subr.mxu0 0.0
  %266 = vmatpush1.msra.mxu0 %v65
  %267 = vmatprep.subr.mxu0 0.0
  %268 = vmatpush1.msra.mxu0 %v64
  %269 = vmatprep.subr.mxu0 0.0
  %270 = vmatpush1.msra.mxu0 %v63
  %271 = vmatprep.subr.mxu0 0.0
  %272 = vmatpush1.msra.mxu0 %v62
  %273 = vmatprep.subr.mxu0 0.0
  %274 = vmatpush1.msra.mxu0 %v61
  %275 = vmatprep.subr.mxu0 0.0
  %276 = vmatpush1.msra.mxu0 %v60
  %277 = vmatprep.subr.mxu0 0.0
  %278 = vmatpush1.msra.mxu0 %v59
  %279 = vmatprep.subr.mxu0 0.0
  %280 = vmatpush1.msra.mxu0 %v58
  %281 = vmatprep.subr.mxu0 0.0
  %282 = vmatpush1.msra.mxu0 %v57
  %283 = vmatprep.subr.mxu0 0.0
  %284 = vmatpush1.msra.mxu0 %v56
  %285 = vmatprep.subr.mxu0 0.0
  %286 = vmatpush2.msra.mxu0 %v87
  %287 = vmatprep.subr.mxu0 0.0
  %288 = vmatpush2.msra.mxu0 %v86
  %289 = vmatprep.subr.mxu0 0.0
  %290 = vmatpush2.msra.mxu0 %v85
  %291 = vmatprep.subr.mxu0 0.0
  %292 = vmatpush2.msra.mxu0 %v84
  %293 = vmatprep.subr.mxu0 0.0
  %294 = vmatpush2.msra.mxu0 %v83
  %295 = vmatprep.subr.mxu0 0.0
  %296 = vmatpush2.msra.mxu0 %v82
  %297 = vmatprep.subr.mxu0 0.0
  %298 = vmatpush2.msra.mxu0 %v81
  %299 = vmatprep.subr.mxu0 0.0
  %300 = vmatpush2.msra.mxu0 %v80
  %301 = vmatprep.subr.mxu0 0.0
  %302 = vmatpush2.msra.mxu0 %v79
  %303 = vmatprep.subr.mxu0 0.0
  %304 = vmatpush2.msra.mxu0 %v78
  %305 = vmatprep.subr.mxu0 0.0
  %306 = vmatpush2.msra.mxu0 %v77
  %307 = vmatprep.subr.mxu0 0.0
  %308 = vmatpush2.msra.mxu0 %v76
  %309 = vmatprep.subr.mxu0 0.0
  %310 = vmatpush2.msra.mxu0 %v75
  %311 = vmatprep.subr.mxu0 0.0
  %312 = vmatpush2.msra.mxu0 %v74
  %313 = vmatprep.subr.mxu0 0.0
  %314 = vmatpush2.msra.mxu0 %v73
  %315 = vmatprep.subr.mxu0 0.0
  %316 = vmatpush2.msra.mxu0 %v72
  %317 = vmatprep.mubr.f32.mxu0 %v17
  %318 = vmatmul.mubr.f32.gmra.mxu0 %v16
  %v319 = vpop.f32.mrf.mxu0
  %v320 = vadd.f32 %v250, %v319
  %v321 = vpop.f32.mrf.mxu0
  %322 = vdwg.mxu0
  %323 = vmatprep.subr.mxu0 0.0
  %324 = vmatpush1.msra.mxu0 %v103
  %325 = vmatprep.subr.mxu0 0.0
  %326 = vmatpush1.msra.mxu0 %v102
  %327 = vmatprep.subr.mxu0 0.0
  %328 = vmatpush1.msra.mxu0 %v101
  %329 = vmatprep.subr.mxu0 0.0
  %330 = vmatpush1.msra.mxu0 %v100
  %331 = vmatprep.subr.mxu0 0.0
  %332 = vmatpush1.msra.mxu0 %v99
  %333 = vmatprep.subr.mxu0 0.0
  %334 = vmatpush1.msra.mxu0 %v98
  %335 = vmatprep.subr.mxu0 0.0
  %336 = vmatpush1.msra.mxu0 %v97
  %337 = vmatprep.subr.mxu0 0.0
  %338 = vmatpush1.msra.mxu0 %v96
  %339 = vmatprep.subr.mxu0 0.0
  %340 = vmatpush1.msra.mxu0 %v95
  %341 = vmatprep.subr.mxu0 0.0
  %342 = vmatpush1.msra.mxu0 %v94
  %343 = vmatprep.subr.mxu0 0.0
  %344 = vmatpush1.msra.mxu0 %v93
  %345 = vmatprep.subr.mxu0 0.0
  %346 = vmatpush1.msra.mxu0 %v92
  %347 = vmatprep.subr.mxu0 0.0
  %348 = vmatpush1.msra.mxu0 %v91
  %349 = vmatprep.subr.mxu0 0.0
  %350 = vmatpush1.msra.mxu0 %v90
  %351 = vmatprep.subr.mxu0 0.0
  %352 = vmatpush1.msra.mxu0 %v89
  %353 = vmatprep.subr.mxu0 0.0
  %354 = vmatpush1.msra.mxu0 %v88
  %355 = vmatprep.subr.mxu0 0.0
  %356 = vmatpush2.msra.mxu0 %v119
  %357 = vmatprep.subr.mxu0 0.0
  %358 = vmatpush2.msra.mxu0 %v118
  %359 = vmatprep.subr.mxu0 0.0
  %360 = vmatpush2.msra.mxu0 %v117
  %361 = vmatprep.subr.mxu0 0.0
  %362 = vmatpush2.msra.mxu0 %v116
  %363 = vmatprep.subr.mxu0 0.0
  %364 = vmatpush2.msra.mxu0 %v115
  %365 = vmatprep.subr.mxu0 0.0
  %366 = vmatpush2.msra.mxu0 %v114
  %367 = vmatprep.subr.mxu0 0.0
  %368 = vmatpush2.msra.mxu0 %v113
  %369 = vmatprep.subr.mxu0 0.0
  %370 = vmatpush2.msra.mxu0 %v112
  %371 = vmatprep.subr.mxu0 0.0
  %372 = vmatpush2.msra.mxu0 %v111
  %373 = vmatprep.subr.mxu0 0.0
  %374 = vmatpush2.msra.mxu0 %v110
  %375 = vmatprep.subr.mxu0 0.0
  %376 = vmatpush2.msra.mxu0 %v109
  %377 = vmatprep.subr.mxu0 0.0
  %378 = vmatpush2.msra.mxu0 %v108
  %379 = vmatprep.subr.mxu0 0.0
  %380 = vmatpush2.msra.mxu0 %v107
  %381 = vmatprep.subr.mxu0 0.0
  %382 = vmatpush2.msra.mxu0 %v106
  %383 = vmatprep.subr.mxu0 0.0
  %384 = vmatpush2.msra.mxu0 %v105
  %385 = vmatprep.subr.mxu0 0.0
  %386 = vmatpush2.msra.mxu0 %v104
  %387 = vmatprep.mubr.f32.mxu0 %v19
  %388 = vmatmul.mubr.f32.gmra.mxu0 %v18
  %v389 = vpop.f32.mrf.mxu0
  %v390 = vadd.f32 %v320, %v389
  %v391 = vpop.f32.mrf.mxu0
  %392 = vdwg.mxu0
  %393 = vmatprep.subr.mxu0 0.0
  %394 = vmatpush1.msra.mxu0 %v135
  %395 = vmatprep.subr.mxu0 0.0
  %396 = vmatpush1.msra.mxu0 %v134
  %397 = vmatprep.subr.mxu0 0.0
  %398 = vmatpush1.msra.mxu0 %v133
  %399 = vmatprep.subr.mxu0 0.0
  %400 = vmatpush1.msra.mxu0 %v132
  %401 = vmatprep.subr.mxu0 0.0
  %402 = vmatpush1.msra.mxu0 %v131
  %403 = vmatprep.subr.mxu0 0.0
  %404 = vmatpush1.msra.mxu0 %v130
  %405 = vmatprep.subr.mxu0 0.0
  %406 = vmatpush1.msra.mxu0 %v129
  %407 = vmatprep.subr.mxu0 0.0
  %408 = vmatpush1.msra.mxu0 %v128
  %409 = vmatprep.subr.mxu0 0.0
  %410 = vmatpush1.msra.mxu0 %v127
  %411 = vmatprep.subr.mxu0 0.0
  %412 = vmatpush1.msra.mxu0 %v126
  %413 = vmatprep.subr.mxu0 0.0
  %414 = vmatpush1.msra.mxu0 %v125
  %415 = vmatprep.subr.mxu0 0.0
  %416 = vmatpush1.msra.mxu0 %v124
  %417 = vmatprep.subr.mxu0 0.0
  %418 = vmatpush1.msra.mxu0 %v123
  %419 = vmatprep.subr.mxu0 0.0
  %420 = vmatpush1.msra.mxu0 %v122
  %421 = vmatprep.subr.mxu0 0.0
  %422 = vmatpush1.msra.mxu0 %v121
  %423 = vmatprep.subr.mxu0 0.0
  %424 = vmatpush1.msra.mxu0 %v120
  %425 = vmatprep.subr.mxu0 0.0
  %426 = vmatpush2.msra.mxu0 %v151
  %427 = vmatprep.subr.mxu0 0.0
  %428 = vmatpush2.msra.mxu0 %v150
  %429 = vmatprep.subr.mxu0 0.0
  %430 = vmatpush2.msra.mxu0 %v149
  %431 = vmatprep.subr.mxu0 0.0
  %432 = vmatpush2.msra.mxu0 %v148
  %433 = vmatprep.subr.mxu0 0.0
  %434 = vmatpush2.msra.mxu0 %v147
  %435 = vmatprep.subr.mxu0 0.0
  %436 = vmatpush2.msra.mxu0 %v146
  %437 = vmatprep.subr.mxu0 0.0
  %438 = vmatpush2.msra.mxu0 %v145
  %439 = vmatprep.subr.mxu0 0.0
  %440 = vmatpush2.msra.mxu0 %v144
  %441 = vmatprep.subr.mxu0 0.0
  %442 = vmatpush2.msra.mxu0 %v143
  %443 = vmatprep.subr.mxu0 0.0
  %444 = vmatpush2.msra.mxu0 %v142
  %445 = vmatprep.subr.mxu0 0.0
  %446 = vmatpush2.msra.mxu0 %v141
  %447 = vmatprep.subr.mxu0 0.0
  %448 = vmatpush2.msra.mxu0 %v140
  %449 = vmatprep.subr.mxu0 0.0
  %450 = vmatpush2.msra.mxu0 %v139
  %451 = vmatprep.subr.mxu0 0.0
  %452 = vmatpush2.msra.mxu0 %v138
  %453 = vmatprep.subr.mxu0 0.0
  %454 = vmatpush2.msra.mxu0 %v137
  %455 = vmatprep.subr.mxu0 0.0
  %456 = vmatpush2.msra.mxu0 %v136
  %457 = vmatprep.mubr.f32.mxu0 %v21
  %458 = vmatmul.mubr.f32.gmra.mxu0 %v20
  %v459 = vpop.f32.mrf.mxu0
  %v460 = vadd.f32 %v390, %v459
  %v461 = vpop.f32.mrf.mxu0
  %462 = vdwg.mxu0
  %463 = vmatprep.subr.mxu0 0.0
  %464 = vmatpush1.msra.mxu0 %v167
  %465 = vmatprep.subr.mxu0 0.0
  %466 = vmatpush1.msra.mxu0 %v166
  %467 = vmatprep.subr.mxu0 0.0
  %468 = vmatpush1.msra.mxu0 %v165
  %469 = vmatprep.subr.mxu0 0.0
  %470 = vmatpush1.msra.mxu0 %v164
  %471 = vmatprep.subr.mxu0 0.0
  %472 = vmatpush1.msra.mxu0 %v163
  %473 = vmatprep.subr.mxu0 0.0
  %474 = vmatpush1.msra.mxu0 %v162
  %475 = vmatprep.subr.mxu0 0.0
  %476 = vmatpush1.msra.mxu0 %v161
  %477 = vmatprep.subr.mxu0 0.0
  %478 = vmatpush1.msra.mxu0 %v160
  %479 = vmatprep.subr.mxu0 0.0
  %480 = vmatpush1.msra.mxu0 %v159
  %481 = vmatprep.subr.mxu0 0.0
  %482 = vmatpush1.msra.mxu0 %v158
  %483 = vmatprep.subr.mxu0 0.0
  %484 = vmatpush1.msra.mxu0 %v157
  %485 = vmatprep.subr.mxu0 0.0
  %486 = vmatpush1.msra.mxu0 %v156
  %487 = vmatprep.subr.mxu0 0.0
  %488 = vmatpush1.msra.mxu0 %v155
  %489 = vmatprep.subr.mxu0 0.0
  %490 = vmatpush1.msra.mxu0 %v154
  %491 = vmatprep.subr.mxu0 0.0
  %492 = vmatpush1.msra.mxu0 %v153
  %493 = vmatprep.subr.mxu0 0.0
  %494 = vmatpush1.msra.mxu0 %v152
  %495 = vmatprep.subr.mxu0 0.0
  %496 = vmatpush2.msra.mxu0 0.0
  %497 = vmatprep.subr.mxu0 0.0
  %498 = vmatpush2.msra.mxu0 0.0
  %499 = vmatprep.subr.mxu0 0.0
  %500 = vmatpush2.msra.mxu0 0.0
  %501 = vmatprep.subr.mxu0 0.0
  %502 = vmatpush2.msra.mxu0 0.0
  %503 = vmatprep.subr.mxu0 0.0
  %504 = vmatpush2.msra.mxu0 0.0
  %505 = vmatprep.subr.mxu0 0.0
  %506 = vmatpush2.msra.mxu0 0.0
  %507 = vmatprep.subr.mxu0 0.0
  %508 = vmatpush2.msra.mxu0 0.0
  %509 = vmatprep.subr.mxu0 0.0
  %510 = vmatpush2.msra.mxu0 0.0
  %511 = vmatprep.subr.mxu0 0.0
  %512 = vmatpush2.msra.mxu0 0.0
  %513 = vmatprep.subr.mxu0 0.0
  %514 = vmatpush2.msra.mxu0 0.0
  %515 = vmatprep.subr.mxu0 0.0
  %516 = vmatpush2.msra.mxu0 %v173
  %517 = vmatprep.subr.mxu0 0.0
  %518 = vmatpush2.msra.mxu0 %v172
  %519 = vmatprep.subr.mxu0 0.0
  %520 = vmatpush2.msra.mxu0 %v171
  %521 = vmatprep.subr.mxu0 0.0
  %522 = vmatpush2.msra.mxu0 %v170
  %523 = vmatprep.subr.mxu0 0.0
  %524 = vmatpush2.msra.mxu0 %v169
  %525 = vmatprep.subr.mxu0 0.0
  %526 = vmatpush2.msra.mxu0 %v168
  %527 = vmatprep.mubr.f32.mxu0 %v181
  %528 = vmatmul.mubr.f32.gmra.mxu0 %v22
  %v529 = vpop.f32.mrf.mxu0
  %v530 = vadd.f32 %v460, %v529
  %v531 = vpop.f32.mrf.mxu0
  %532 = vdwg.mxu0
  %vm533 = vcmp.gt.f32.partialorder %v530, 0.0
  %v534 = vmul.f32 %v530, 0.01
  %v535 = vsel %vm533, %v530, %v534
  %v536 = vld [vmem:[%s2 + $0x1] sm:$0x1]
  %v537 = vlaneseq
  %v538 = vshrl.u32 %v537, 7
  %v539 = vsub.s32 0, %v538
  %v540 = vrot.slane %v536, %v539
  %v541 = vmul.f32 %v535, %v540
  %vm542 = vcmask 261120
  %v543 = vsel %vm542, %v541, 0.0
  %544 = vadd.xlane.f32.xlu0 %v543
  %v545 = vpop.xlane.xlu0 %544
  %v546 = vld [vmem:[%s2 + $0x2] sm:$0x1]
  %v547 = vlaneseq
  %v548 = vshrl.u32 %v547, 7
  %v549 = vsub.s32 0, %v548
  %v550 = vrot.slane %v546, %v549
  %v551 = vadd.f32 %v545, %v550
  %vm552 = vcmask 7168
  %553 = vst.msk [vmem:[%s3] sm:$0xff] %vm552, %v551
  // Predicated region
  $region14: #{tpu_custom_call.1} parent=0 // pred_check
    _
  $region15: #{tpu_custom_call.1} parent=0 // pred_check_branch
    %555 = sbr.rel (0) target = $region17
  $region16: #{tpu_custom_call.1} parent=0 // pred_region
    _
  $region17: #{tpu_custom_call.1} parent=0 // pred_fallthru
    _
  // Predicated region
  $region18: #{tpu_custom_call.1} parent=0 // pred_check
    _
  $region19: #{tpu_custom_call.1} parent=0 // pred_check_branch
    %557 = sbr.rel (0) target = $region21
  $region20: #{tpu_custom_call.1} parent=0 // pred_region
    _
  $region21: #{tpu_custom_call.1} parent=0 // pred_fallthru
    _

</llo_original>
